<compile_context>
chip_gen: v5e
topology: v5e:2x2
jax: 0.10.0
libtpu: 0.0.40
codegen_flags: <defaults>
</compile_context>

<pallas_src>
import functools

import jax
import jax.numpy as jnp
from jax import lax
from jax.experimental import pallas as pl
from jax.experimental.pallas import tpu as pltpu

EPS = 1e-5


def _round_up(a, b):
    return (a + b - 1) // b * b


def _cdiv(a, b):
    return (a + b - 1) // b


def _conv_stats_kernel(w_ref, x_ref, conv_ref, sum_ref, m2_ref, *, dhw, tile):
    """One (sample, dhw-tile): conv = w_T @ x_tile (bf16 in, f32 acc) on the MXU,
    bf16 writeback of conv, plus per-tile mean-shifted BatchNorm partial stats."""
    t = pl.program_id(1)
    conv = jnp.dot(w_ref[...], x_ref[0],
                   preferred_element_type=jnp.float32)       # (Cout_p, tile) f32
    conv_ref[0] = conv.astype(conv_ref.dtype)                # bf16 intermediate

    # Valid (non DHW-padding) columns in this tile (>= 1 by construction).
    cnt = jnp.minimum(dhw - t * tile, tile).astype(jnp.float32)

    if dhw % tile != 0:                                      # trace-time branch
        col = lax.broadcasted_iota(jnp.int32, conv.shape, 1) + t * tile
        valid = col < dhw
        cm = jnp.where(valid, conv, 0.0)
    else:
        valid = None
        cm = conv

    s = jnp.sum(cm, axis=-1, keepdims=True)                  # (Cout_p, 1)
    mean_t = s / cnt
    diff = conv - mean_t
    if valid is not None:
        diff = jnp.where(valid, diff, 0.0)
    m2 = jnp.sum(diff * diff, axis=-1, keepdims=True)        # (Cout_p, 1)

    sum_ref[...] = s[None, None]                             # (1, 1, Cout_p, 1)
    m2_ref[...] = m2[None, None]


def _bn_relu_kernel(scale_ref, shift_ref, conv_ref, out_ref):
    """One (sample, dhw-tile): y = relu(conv * scale + shift), folded BN."""
    out_ref[0] = jnp.maximum(
        conv_ref[0].astype(jnp.float32) * scale_ref[...] + shift_ref[...], 0.0)


@functools.partial(jax.jit, static_argnames=("kernel_size", "padding", "tile_dhw"))
def basic_block_batchnorm(x, weight, gamma, beta,
                          kernel_size=3, padding=1, tile_dhw=None):
    """Forward of BasicBlockBatchNorm (type='conv', stride=1, dilation=1)."""
    N, Cin, D, H, W = x.shape
    Cout = weight.shape[0]
    K = kernel_size
    p = padding
    Do, Ho, Wo = D + 2 * p - (K - 1), H + 2 * p - (K - 1), W + 2 * p - (K - 1)
    DHW = Do * Ho * Wo
    CK = K * K * K * Cin
    CK_p = _round_up(CK, 128)        # lane dim of w_t, contraction dim (zero-padded)
    Cout_p = _round_up(Cout, 8)      # sublane dim of conv / output blocks

    # ---- tile on the lane (DHW) axis --------------------------------------
    if tile_dhw is None:
        cap = _round_up(DHW, 128)
        tile_dhw = 128
        for cand in (2048, 1024, 512, 256, 128):
            if cand > cap:
                continue
            # conservative double-buffered per-step VMEM bytes (both passes)
            need = 2 * (CK_p * cand * 2 + Cout_p * cand * 2
                        + Cout_p * CK_p * 2 + Cout_p * cand * 4)
            if need <= (40 << 20):
                tile_dhw = cand
                break
        # v7x: keep >= 2 total grid steps so both TensorCores get work.
        if N * _cdiv(DHW, tile_dhw) < 2 and tile_dhw > 128:
            tile_dhw = max(128, _round_up(_cdiv(DHW, 2), 128))
    tile_dhw = _round_up(tile_dhw, 128)
    DHW_p = _round_up(DHW, tile_dhw)
    n_tiles = DHW_p // tile_dhw

    # ---- build the im2col slab in matmul layout, bf16, no transposes ------
    # TODO(synk): for real model shapes, replace this K^3-duplicated HBM slab
    # with in-kernel tap gathering from a halo-padded x (pl.ANY + make_async_copy).
    xb = x.astype(jnp.bfloat16)                     # cast BEFORE pad / im2col
    x_pad = jnp.pad(xb, ((0, 0), (0, 0), (p, p), (p, p), (p, p)))
    taps = []
    for kd in range(K):
        for kh in range(K):
            for kw in range(K):
                taps.append(
                    x_pad[:, :, kd:kd + Do, kh:kh + Ho, kw:kw + Wo]
                    .reshape(N, Cin, DHW))
    x_t = jnp.concatenate(taps, axis=1)             # (N, CK, DHW) bf16
    x_t = jnp.pad(x_t, ((0, 0), (0, CK_p - CK), (0, DHW_p - DHW)))

    # (Cout, Cin, KD, KH, KW) -> (Cout, KD, KH, KW, Cin) -> (Cout_p, CK_p) bf16
    w_t = jnp.transpose(weight, (0, 2, 3, 4, 1)).reshape(Cout, CK)
    w_t = jnp.pad(w_t.astype(jnp.bfloat16), ((0, Cout_p - Cout), (0, CK_p - CK)))

    params = pltpu.CompilerParams(
        dimension_semantics=("parallel", "parallel"),
        vmem_limit_bytes=48 << 20)
    grid = (N, n_tiles)

    # ---------------- pass 1: conv matmul + per-tile BN partial stats ------
    kern1 = functools.partial(_conv_stats_kernel, dhw=DHW, tile=tile_dhw)
    conv_t, tsum, tm2 = pl.pallas_call(
        kern1,
        grid=grid,
        in_specs=[
            pl.BlockSpec((Cout_p, CK_p), lambda n, t: (0, 0)),
            pl.BlockSpec((1, CK_p, tile_dhw), lambda n, t: (n, 0, t)),
        ],
        out_specs=(
            pl.BlockSpec((1, Cout_p, tile_dhw), lambda n, t: (n, 0, t)),
            pl.BlockSpec((1, 1, Cout_p, 1), lambda n, t: (n, t, 0, 0)),
            pl.BlockSpec((1, 1, Cout_p, 1), lambda n, t: (n, t, 0, 0)),
        ),
        out_shape=(
            jax.ShapeDtypeStruct((N, Cout_p, DHW_p), jnp.bfloat16),
            jax.ShapeDtypeStruct((N, n_tiles, Cout_p, 1), jnp.float32),
            jax.ShapeDtypeStruct((N, n_tiles, Cout_p, 1), jnp.float32),
        ),
        compiler_params=params,
    )(w_t, x_t)

    # ---- global BatchNorm stats: Welford-style cross-tile combine ---------
    s = tsum[..., 0]                                      # (N, n_tiles, Cout_p)
    m2 = tm2[..., 0]
    cnt = jnp.minimum(DHW - jnp.arange(n_tiles) * tile_dhw, tile_dhw)
    cnt = cnt.astype(jnp.float32)[None, :, None]          # (1, n_tiles, 1)
    m_total = float(N * DHW)                              # true count (no padding)
    mean = jnp.sum(s, axis=(0, 1)) / m_total              # (Cout_p,)
    mean_i = s / cnt
    m2_total = (jnp.sum(m2, axis=(0, 1))
                + jnp.sum(cnt * (mean_i - mean) ** 2, axis=(0, 1)))
    var = jnp.maximum(m2_total / m_total, 0.0)            # biased (training mode)
    inv = lax.rsqrt(var + EPS)

    g = jnp.pad(gamma.astype(jnp.float32), (0, Cout_p - Cout))
    b = jnp.pad(beta.astype(jnp.float32), (0, Cout_p - Cout))
    scale = (g * inv).reshape(Cout_p, 1)                  # folded per-channel
    shift = (b - mean * g * inv).reshape(Cout_p, 1)

    # ---------------- pass 2: fused normalize + ReLU, final layout ---------
    out_full = pl.pallas_call(
        _bn_relu_kernel,
        grid=grid,
        in_specs=[
            pl.BlockSpec((Cout_p, 1), lambda n, t: (0, 0)),
            pl.BlockSpec((Cout_p, 1), lambda n, t: (0, 0)),
            pl.BlockSpec((1, Cout_p, tile_dhw), lambda n, t: (n, 0, t)),
        ],
        out_specs=pl.BlockSpec((1, Cout_p, tile_dhw), lambda n, t: (n, 0, t)),
        out_shape=jax.ShapeDtypeStruct((N, Cout_p, DHW_p), jnp.float32),
        compiler_params=params,
    )(scale, shift, conv_t)

    # Already (N, Cout, DHW)-ordered: slicing off the zero padding and
    # reshaping is free (no transpose).
    return out_full[:, :Cout, :DHW].reshape(N, Cout, Do, Ho, Wo)


def _reference(x_ncdhw, weight, gamma, beta, padding=1):
    """Pure-JAX f32 reference (conv + training-mode BN + ReLU)."""
    out = lax.conv_general_dilated(
        x_ncdhw.astype(jnp.float32), weight.astype(jnp.float32),
        window_strides=(1, 1, 1),
        padding=[(padding, padding)] * 3,
        dimension_numbers=("NCDHW", "OIDHW", "NCDHW"),
        precision=lax.Precision.HIGHEST)
    mean = jnp.mean(out, axis=(0, 2, 3, 4), keepdims=True)
    var = jnp.mean((out - mean) ** 2, axis=(0, 2, 3, 4), keepdims=True)
    out = (out - mean) * lax.rsqrt(var + EPS)
    out = out * gamma.reshape(1, -1, 1, 1, 1) + beta.reshape(1, -1, 1, 1, 1)
    return jnp.maximum(out, 0.0)


def _run_case(key, N, Cin, Cout, D, H, W, K, tile_dhw):
    kx, kw = jax.random.split(key)
    x = jax.random.normal(kx, (N, Cin, D, H, W), dtype=jnp.float32)
    fan_in = Cin * K * K * K
    fan_out = Cout * K * K * K
    std = (2.0 / (fan_in + fan_out)) ** 0.5
    weight = std * jax.random.normal(kw, (Cout, Cin, K, K, K), dtype=jnp.float32)
    gamma = jnp.ones((Cout,), jnp.float32)
    beta = jnp.zeros((Cout,), jnp.float32)

    out = basic_block_batchnorm(x, weight, gamma, beta,
                                kernel_size=K, padding=1, tile_dhw=tile_dhw)
    out = jax.block_until_ready(out)
    ref = _reference(x, weight, gamma, beta, padding=1)

    assert out.shape == ref.shape, (out.shape, ref.shape)
    max_err = float(jnp.max(jnp.abs(out - ref)))
    # bf16 MXU operands + bf16 conv intermediate -> relaxed tolerance vs f32 ref.
    assert jnp.allclose(out, ref, atol=3e-2, rtol=3e-2), max_err


if __name__ == "__main__":
    key = jax.random.PRNGKey(0)
    k1, k2 = jax.random.split(key)

    # Main toy case: N=2, Cin=4, Cout=8, D=4, H=W=8; tile_dhw=128 exercises the
    # cross-tile Welford combine (grid (2, 2)).
    _run_case(k1, N=2, Cin=4, Cout=8, D=4, H=8, W=8, K=3, tile_dhw=128)

    # Ragged case: DHW=196 is not a multiple of 128 -> exercises zero-padded
    # DHW columns + in-kernel validity mask for the stats.
    _run_case(k2, N=2, Cin=4, Cout=8, D=4, H=7, W=7, K=3, tile_dhw=None)

    print("KERNEL_OK")
</pallas_src>

<mosaic_0001>
module attributes {stable_mosaic.version = 11 : i64} {
  func.func @_conv_stats_kernel(%arg0: i32, %arg1: i32, %arg2: memref<8x128xbf16, #tpu.memory_space<vmem>>, %arg3: memref<1x128x128xbf16, #tpu.memory_space<vmem>>, %arg4: memref<1x8x128xbf16, #tpu.memory_space<vmem>>, %arg5: memref<1x1x8x1xf32, #tpu.memory_space<vmem>>, %arg6: memref<1x1x8x1xf32, #tpu.memory_space<vmem>>) attributes {dimension_semantics = [#tpu.dimension_semantics<parallel>, #tpu.dimension_semantics<parallel>], iteration_bounds = array<i64: 2, 2>, scalar_prefetch = 0 : i64, scratch_operands = 0 : i64, tpu.core_type = #tpu.core_type<tc>, window_params = [{pipeline_mode = #tpu.pipeline_mode<synchronous>, transform_indices = @transform_0, window_bounds = array<i64: 8, 128>}, {transform_indices = @transform_1, window_bounds = array<i64: 1, 128, 128>}, {transform_indices = @transform_2, window_bounds = array<i64: 1, 8, 128>}, {transform_indices = @transform_3, window_bounds = array<i64: 1, 1, 8, 1>}, {transform_indices = @transform_4, window_bounds = array<i64: 1, 1, 8, 1>}]} {
    %c0 = arith.constant 0 : index
    %c0_0 = arith.constant 0 : index
    %0 = vector.load %arg2[%c0, %c0_0] : memref<8x128xbf16, #tpu.memory_space<vmem>>, vector<8x128xbf16>
    %c0_1 = arith.constant 0 : index
    %c0_2 = arith.constant 0 : index
    %c0_3 = arith.constant 0 : index
    %1 = vector.load %arg3[%c0_1, %c0_2, %c0_3] : memref<1x128x128xbf16, #tpu.memory_space<vmem>>, vector<1x128x128xbf16>
    %2 = vector.shape_cast %1 : vector<1x128x128xbf16> to vector<128x128xbf16>
    %cst = arith.constant dense<0.000000e+00> : vector<8x128xf32>
    %3 = tpu.matmul %0, %2, %cst {dimension_numbers = #tpu.dot_dimension_numbers<[1], [0], [0], [1], [0, 0, 1, 1], [], []>} : vector<8x128xbf16>, vector<128x128xbf16>, vector<8x128xf32> -> vector<8x128xf32>
    %4 = arith.truncf %3 : vector<8x128xf32> to vector<8x128xbf16>
    %c0_4 = arith.constant 0 : index
    %c0_5 = arith.constant 0 : index
    %c0_6 = arith.constant 0 : index
    %5 = vector.load %arg4[%c0_4, %c0_5, %c0_6] : memref<1x8x128xbf16, #tpu.memory_space<vmem>>, vector<1x8x128xbf16>
    %6 = vector.shape_cast %5 : vector<1x8x128xbf16> to vector<8x128xbf16>
    %7 = vector.shape_cast %4 : vector<8x128xbf16> to vector<1x8x128xbf16>
    tpu.vector_store %arg4[%c0_4, %c0_5, %c0_6], %7 {strides = array<i32>} : memref<1x8x128xbf16, #tpu.memory_space<vmem>>, vector<1x8x128xbf16>,
    %c128_i32 = arith.constant 128 : i32
    %8 = arith.muli %arg1, %c128_i32 : i32
    %c256_i32 = arith.constant 256 : i32
    %9 = arith.subi %c256_i32, %8 : i32
    %c128_i32_7 = arith.constant 128 : i32
    %10 = arith.minsi %9, %c128_i32_7 : i32
    %11 = arith.sitofp %10 : i32 to f32
    %cst_8 = arith.constant dense<0.000000e+00> : vector<8xf32>
    %12 = vector.multi_reduction <add>, %3, %cst_8 [1] : vector<8x128xf32> to vector<8xf32>
    %13 = vector.shape_cast %12 : vector<8xf32> to vector<8x1xf32>
    %14 = vector.broadcast %11 : f32 to vector<8x1xf32>
    %15 = arith.divf %13, %14 : vector<8x1xf32>
    %16 = vector.broadcast %15 : vector<8x1xf32> to vector<8x128xf32>
    %17 = arith.subf %3, %16 : vector<8x128xf32>
    %18 = arith.mulf %17, %17 : vector<8x128xf32>
    %cst_9 = arith.constant dense<0.000000e+00> : vector<8xf32>
    %19 = vector.multi_reduction <add>, %18, %cst_9 [1] : vector<8x128xf32> to vector<8xf32>
    %20 = vector.shape_cast %19 : vector<8xf32> to vector<8x1xf32>
    %21 = vector.shape_cast %13 : vector<8x1xf32> to vector<1x1x8x1xf32>
    %c0_10 = arith.constant 0 : index
    %c0_11 = arith.constant 0 : index
    %c0_12 = arith.constant 0 : index
    %c0_13 = arith.constant 0 : index
    %22 = vector.load %arg5[%c0_10, %c0_11, %c0_12, %c0_13] : memref<1x1x8x1xf32, #tpu.memory_space<vmem>>, vector<1x1x8x1xf32>
    tpu.vector_store %arg5[%c0_10, %c0_11, %c0_12, %c0_13], %21 {strides = array<i32>} : memref<1x1x8x1xf32, #tpu.memory_space<vmem>>, vector<1x1x8x1xf32>,
    %23 = vector.shape_cast %20 : vector<8x1xf32> to vector<1x1x8x1xf32>
    %c0_14 = arith.constant 0 : index
    %c0_15 = arith.constant 0 : index
    %c0_16 = arith.constant 0 : index
    %c0_17 = arith.constant 0 : index
    %24 = vector.load %arg6[%c0_14, %c0_15, %c0_16, %c0_17] : memref<1x1x8x1xf32, #tpu.memory_space<vmem>>, vector<1x1x8x1xf32>
    tpu.vector_store %arg6[%c0_14, %c0_15, %c0_16, %c0_17], %23 {strides = array<i32>} : memref<1x1x8x1xf32, #tpu.memory_space<vmem>>, vector<1x1x8x1xf32>,
    return
  }
  func.func @transform_0(%arg0: i32, %arg1: i32) -> (i32, i32) {
    %c0_i32 = arith.constant 0 : i32
    %c0_i32_0 = arith.constant 0 : i32
    %c0_i32_1 = arith.constant 0 : i32
    return %c0_i32, %c0_i32_0 : i32, i32
  }
  func.func @transform_1(%arg0: i32, %arg1: i32) -> (i32, i32, i32) {
    %c0_i32 = arith.constant 0 : i32
    %c0_i32_0 = arith.constant 0 : i32
    return %arg0, %c0_i32, %arg1 : i32, i32, i32
  }
  func.func @transform_2(%arg0: i32, %arg1: i32) -> (i32, i32, i32) {
    %c0_i32 = arith.constant 0 : i32
    %c0_i32_0 = arith.constant 0 : i32
    return %arg0, %c0_i32, %arg1 : i32, i32, i32
  }
  func.func @transform_3(%arg0: i32, %arg1: i32) -> (i32, i32, i32, i32) {
    %c0_i32 = arith.constant 0 : i32
    %c0_i32_0 = arith.constant 0 : i32
    %c0_i32_1 = arith.constant 0 : i32
    return %arg0, %arg1, %c0_i32, %c0_i32_0 : i32, i32, i32, i32
  }
  func.func @transform_4(%arg0: i32, %arg1: i32) -> (i32, i32, i32, i32) {
    %c0_i32 = arith.constant 0 : i32
    %c0_i32_0 = arith.constant 0 : i32
    %c0_i32_1 = arith.constant 0 : i32
    return %arg0, %arg1, %c0_i32, %c0_i32_0 : i32, i32, i32, i32
  }
}

module attributes {stable_mosaic.version = 11 : i64} {
  func.func @_bn_relu_kernel(%arg0: i32, %arg1: i32, %arg2: memref<8x1xf32, #tpu.memory_space<vmem>>, %arg3: memref<8x1xf32, #tpu.memory_space<vmem>>, %arg4: memref<1x8x128xbf16, #tpu.memory_space<vmem>>, %arg5: memref<1x8x128xf32, #tpu.memory_space<vmem>>) attributes {dimension_semantics = [#tpu.dimension_semantics<parallel>, #tpu.dimension_semantics<parallel>], iteration_bounds = array<i64: 2, 2>, scalar_prefetch = 0 : i64, scratch_operands = 0 : i64, tpu.core_type = #tpu.core_type<tc>, window_params = [{pipeline_mode = #tpu.pipeline_mode<synchronous>, transform_indices = @transform_0, window_bounds = array<i64: 8, 1>}, {pipeline_mode = #tpu.pipeline_mode<synchronous>, transform_indices = @transform_1, window_bounds = array<i64: 8, 1>}, {transform_indices = @transform_2, window_bounds = array<i64: 1, 8, 128>}, {transform_indices = @transform_3, window_bounds = array<i64: 1, 8, 128>}]} {
    %c0 = arith.constant 0 : index
    %c0_0 = arith.constant 0 : index
    %c0_1 = arith.constant 0 : index
    %0 = vector.load %arg4[%c0, %c0_0, %c0_1] : memref<1x8x128xbf16, #tpu.memory_space<vmem>>, vector<1x8x128xbf16>
    %1 = vector.shape_cast %0 : vector<1x8x128xbf16> to vector<8x128xbf16>
    %2 = arith.extf %1 : vector<8x128xbf16> to vector<8x128xf32>
    %c0_2 = arith.constant 0 : index
    %c0_3 = arith.constant 0 : index
    %3 = vector.load %arg2[%c0_2, %c0_3] : memref<8x1xf32, #tpu.memory_space<vmem>>, vector<8x1xf32>
    %4 = vector.broadcast %3 : vector<8x1xf32> to vector<8x128xf32>
    %5 = arith.mulf %2, %4 : vector<8x128xf32>
    %c0_4 = arith.constant 0 : index
    %c0_5 = arith.constant 0 : index
    %6 = vector.load %arg3[%c0_4, %c0_5] : memref<8x1xf32, #tpu.memory_space<vmem>>, vector<8x1xf32>
    %7 = vector.broadcast %6 : vector<8x1xf32> to vector<8x128xf32>
    %8 = arith.addf %5, %7 : vector<8x128xf32>
    %cst = arith.constant 0.000000e+00 : f32
    %9 = vector.broadcast %cst : f32 to vector<8x128xf32>
    %10 = arith.maximumf %8, %9 : vector<8x128xf32>
    %c0_6 = arith.constant 0 : index
    %c0_7 = arith.constant 0 : index
    %c0_8 = arith.constant 0 : index
    %11 = vector.load %arg5[%c0_6, %c0_7, %c0_8] : memref<1x8x128xf32, #tpu.memory_space<vmem>>, vector<1x8x128xf32>
    %12 = vector.shape_cast %11 : vector<1x8x128xf32> to vector<8x128xf32>
    %13 = vector.shape_cast %10 : vector<8x128xf32> to vector<1x8x128xf32>
    tpu.vector_store %arg5[%c0_6, %c0_7, %c0_8], %13 {strides = array<i32>} : memref<1x8x128xf32, #tpu.memory_space<vmem>>, vector<1x8x128xf32>,
    return
  }
  func.func @transform_0(%arg0: i32, %arg1: i32) -> (i32, i32) {
    %c0_i32 = arith.constant 0 : i32
    %c0_i32_0 = arith.constant 0 : i32
    %c0_i32_1 = arith.constant 0 : i32
    return %c0_i32, %c0_i32_0 : i32, i32
  }
  func.func @transform_1(%arg0: i32, %arg1: i32) -> (i32, i32) {
    %c0_i32 = arith.constant 0 : i32
    %c0_i32_0 = arith.constant 0 : i32
    %c0_i32_1 = arith.constant 0 : i32
    return %c0_i32, %c0_i32_0 : i32, i32
  }
  func.func @transform_2(%arg0: i32, %arg1: i32) -> (i32, i32, i32) {
    %c0_i32 = arith.constant 0 : i32
    %c0_i32_0 = arith.constant 0 : i32
    return %arg0, %c0_i32, %arg1 : i32, i32, i32
  }
  func.func @transform_3(%arg0: i32, %arg1: i32) -> (i32, i32, i32) {
    %c0_i32 = arith.constant 0 : i32
    %c0_i32_0 = arith.constant 0 : i32
    return %arg0, %c0_i32, %arg1 : i32, i32, i32
  }
}

</mosaic_0001>

<llo_original>
// kernel: basic_block_batchnorm.2
$region0: #{basic_block_batchnorm.2}
  #allocation0 [shape = 'u32[]', space=smem, size = 0x4, offset = 0x4, fixed_abs, tag = 'smem constant byte address 0x4 - core index']
  #allocation1 [shape = 'u32[72,128]{1,0:T(1,128)}', space=vmem, size = 0x9000, scoped, tag = 'internal scratch']
  %s0 = inlined_call_operand.vmem [shape: bf16[8,128], index: 0, kind: input, shape index: {}]
  %s1 = inlined_call_operand.vmem [shape: bf16[2,128,256], index: 1, kind: input, shape index: {}]
  %s2 = inlined_call_operand.vmem [shape: bf16[2,8,256], index: 2, kind: output, shape index: {0}]
  %s3 = inlined_call_operand.vmem [shape: f32[2,2,8,1], index: 3, kind: output, shape index: {1}]
  %s4 = inlined_call_operand.vmem [shape: f32[2,2,8,1], index: 4, kind: output, shape index: {2}]
  %5 = xla_tuple %s2, %s3, %s4
  %s6 = sld [smem:[#allocation0]]
  $region98: #{basic_block_batchnorm.2} parent=0
    _
  %s8 = ssub.s32 1, %s6
  %s9 = scalar_select 0, %s8, %s6
  $region1: #{basic_block_batchnorm.2} parent=0
    #allocation2 [shape = 'u8[65536]{0}', space=vmem, size = 0x10000, scoped, tag = 'input window, operand 1']
    loop: start=0, step=1, limit=6
    $region2: #{basic_block_batchnorm.2} parent=1 // loop_pre_header
      _
    $region3: #{basic_block_batchnorm.2} parent=1 // loop_header
      %s11 = sphi 0, %s15
      %p12 = scmp.ge.s32.totalorder %s11, 6
      %s18 = sphi 0, %s30
      %s19 = sphi 0, %s26
      %s20 = sphi 0, %s18
      %s21 = sphi 0, %s19
      %s22 = sphi 0, %s20
      %s23 = sphi 0, %s21
      %s31 = sphi 0, %s31
      %s33 = sphi 0, %s31
      %s34 = sphi 0, %s33
      %s48 = sphi 0, %s34
      %s56 = sphi 0, %s58
      %s59 = sphi 0, %s56
      %s60 = sphi 0, %s59
      %s76 = sphi 0, %s60
      %s84 = sphi 0, %s86
      %s87 = sphi 0, %s84
      %s88 = sphi 0, %s87
      %s104 = sphi 0, %s88
      %s112 = sphi 0, %s114
      %s115 = sphi 0, %s112
      %s116 = sphi 0, %s115
      %s132 = sphi 0, %s116
      %s140 = sphi 0, %s142
      %s143 = sphi 0, %s140
      %s144 = sphi 0, %s143
      %s160 = sphi 0, %s144
    $region4: #{basic_block_batchnorm.2} parent=1 // loop_header_branch
      %14 = sbr.rel (%p12) target = $region8
    $region5: #{basic_block_batchnorm.2} parent=1 // loop_body
      %s16 = ssub.s32 %s11, 1
      %s17 = ssub.s32 %s11, 2
      %s24 = sadd.s32 1, %s19
      %p25 = scmp.ge.s32.totalorder %s24, 2
      %s26 = scalar_select %p25, 0, %s24
      %s27 = sadd.s32 1, %s18
      %s28 = scalar_select %p25, %s27, %s18
      %p29 = scmp.ge.s32.totalorder %s28, 2
      %s30 = scalar_select %p29, 0, %s28
      %s32 = sadd.s32 %s31, 1
      %p35 = scmp.eq.s32.totalorder %s11, 3
      %p36 = scmp.ne.s32.totalorder %s31, %s33
      %p37 = scmp.eq.s32.totalorder %s11, 0
      %p38 = por %p36, %p37
      %p39 = scmp.ne.s32.totalorder %s31, %s33
      %p40 = scmp.eq.s32.totalorder %s16, 3
      %p41 = por %p39, %p40
      %p42 = scmp.ne.s32.totalorder %s33, %s34
      %p43 = scmp.eq.s32.totalorder %s16, 0
      %p44 = por %p42, %p43
      %p45 = scmp.ne.s32.totalorder %s33, %s34
      %p46 = scmp.eq.s32.totalorder %s17, 3
      %p47 = por %p45, %p46
      %p49 = scmp.ne.s32.totalorder %s34, %s48
      %p50 = scmp.eq.s32.totalorder %s17, 0
      %p51 = por %p49, %p50
      %s52 = ssub.s32 %s18, %s30
      %s53 = ssub.s32 %s19, %s26
      %s54 = sor.u32 %s52, %s53
      %p55 = scmp.eq.s32.totalorder %s54, 0
      %s57 = sadd.s32 %s56, 1
      %s58 = scalar_select %p55, %s56, %s57
      %p61 = pneg %p55
      %p62 = scmp.eq.s32.totalorder %s11, 3
      %p63 = por %p61, %p62
      %p64 = scmp.ne.s32.totalorder %s56, %s59
      %p65 = scmp.eq.s32.totalorder %s11, 0
      %p66 = por %p64, %p65
      %p67 = scmp.ne.s32.totalorder %s56, %s59
      %p68 = scmp.eq.s32.totalorder %s16, 3
      %p69 = por %p67, %p68
      %p70 = scmp.ne.s32.totalorder %s59, %s60
      %p71 = scmp.eq.s32.totalorder %s16, 0
      %p72 = por %p70, %p71
      %p73 = scmp.ne.s32.totalorder %s59, %s60
      %p74 = scmp.eq.s32.totalorder %s17, 3
      %p75 = por %p73, %p74
      %p77 = scmp.ne.s32.totalorder %s60, %s76
      %p78 = scmp.eq.s32.totalorder %s17, 0
      %p79 = por %p77, %p78
      %s80 = ssub.s32 %s18, %s30
      %s81 = ssub.s32 %s19, %s26
      %s82 = sor.u32 %s80, %s81
      %p83 = scmp.eq.s32.totalorder %s82, 0
      %s85 = sadd.s32 %s84, 1
      %s86 = scalar_select %p83, %s84, %s85
      %p89 = pneg %p83
      %p90 = scmp.eq.s32.totalorder %s11, 3
      %p91 = por %p89, %p90
      %p92 = scmp.ne.s32.totalorder %s84, %s87
      %p93 = scmp.eq.s32.totalorder %s11, 0
      %p94 = por %p92, %p93
      %p95 = scmp.ne.s32.totalorder %s84, %s87
      %p96 = scmp.eq.s32.totalorder %s16, 3
      %p97 = por %p95, %p96
      %p98 = scmp.ne.s32.totalorder %s87, %s88
      %p99 = scmp.eq.s32.totalorder %s16, 0
      %p100 = por %p98, %p99
      %p101 = scmp.ne.s32.totalorder %s87, %s88
      %p102 = scmp.eq.s32.totalorder %s17, 3
      %p103 = por %p101, %p102
      %p105 = scmp.ne.s32.totalorder %s88, %s104
      %p106 = scmp.eq.s32.totalorder %s17, 0
      %p107 = por %p105, %p106
      %s108 = ssub.s32 %s18, %s30
      %s109 = ssub.s32 %s19, %s26
      %s110 = sor.u32 %s108, %s109
      %p111 = scmp.eq.s32.totalorder %s110, 0
      %s113 = sadd.s32 %s112, 1
      %s114 = scalar_select %p111, %s112, %s113
      %p117 = pneg %p111
      %p118 = scmp.eq.s32.totalorder %s11, 3
      %p119 = por %p117, %p118
      %p120 = scmp.ne.s32.totalorder %s112, %s115
      %p121 = scmp.eq.s32.totalorder %s11, 0
      %p122 = por %p120, %p121
      %p123 = scmp.ne.s32.totalorder %s112, %s115
      %p124 = scmp.eq.s32.totalorder %s16, 3
      %p125 = por %p123, %p124
      %p126 = scmp.ne.s32.totalorder %s115, %s116
      %p127 = scmp.eq.s32.totalorder %s16, 0
      %p128 = por %p126, %p127
      %p129 = scmp.ne.s32.totalorder %s115, %s116
      %p130 = scmp.eq.s32.totalorder %s17, 3
      %p131 = por %p129, %p130
      %p133 = scmp.ne.s32.totalorder %s116, %s132
      %p134 = scmp.eq.s32.totalorder %s17, 0
      %p135 = por %p133, %p134
      %s136 = ssub.s32 %s18, %s30
      %s137 = ssub.s32 %s19, %s26
      %s138 = sor.u32 %s136, %s137
      %p139 = scmp.eq.s32.totalorder %s138, 0
      %s141 = sadd.s32 %s140, 1
      %s142 = scalar_select %p139, %s140, %s141
      %p145 = pneg %p139
      %p146 = scmp.eq.s32.totalorder %s11, 3
      %p147 = por %p145, %p146
      %p148 = scmp.ne.s32.totalorder %s140, %s143
      %p149 = scmp.eq.s32.totalorder %s11, 0
      %p150 = por %p148, %p149
      %p151 = scmp.ne.s32.totalorder %s140, %s143
      %p152 = scmp.eq.s32.totalorder %s16, 3
      %p153 = por %p151, %p152
      %p154 = scmp.ne.s32.totalorder %s143, %s144
      %p155 = scmp.eq.s32.totalorder %s16, 0
      %p156 = por %p154, %p155
      %p157 = scmp.ne.s32.totalorder %s143, %s144
      %p158 = scmp.eq.s32.totalorder %s17, 3
      %p159 = por %p157, %p158
      %p161 = scmp.ne.s32.totalorder %s144, %s160
      %p162 = scmp.eq.s32.totalorder %s17, 0
      %p163 = por %p161, %p162
      %p164 = scmp.le.s32.totalorder 1, %s11
      %p165 = scmp.lt.s32.totalorder %s11, 5
      %p166 = pnand %p164, %p165
      %p167 = pneg %p166
      // Predicated region
      $region9: #{basic_block_batchnorm.2} parent=5 // pred_check
        _
      $region10: #{basic_block_batchnorm.2} parent=5 // pred_check_branch
        %169 = sbr.rel (%p166) target = $region12
      $region11: #{basic_block_batchnorm.2} parent=5 // pred_region
        %s170 = ssub.s32 %s11, 1
        // Predicated region
        $region13: #{basic_block_batchnorm.2} parent=11 // pred_check
          %p171 = pneg %p44
        $region14: #{basic_block_batchnorm.2} parent=11 // pred_check_branch
          %173 = sbr.rel (%p171) target = $region16
        $region15: #{basic_block_batchnorm.2} parent=11 // pred_region
          _
        $region16: #{basic_block_batchnorm.2} parent=11 // pred_fallthru
          _
      $region12: #{basic_block_batchnorm.2} parent=5 // pred_fallthru
        _
      %p174 = scmp.lt.s32.totalorder %s11, 4
      // Predicated region
      $region17: #{basic_block_batchnorm.2} parent=5 // pred_check
        %p175 = pneg %p174
      $region18: #{basic_block_batchnorm.2} parent=5 // pred_check_branch
        %177 = sbr.rel (%p175) target = $region20
      $region19: #{basic_block_batchnorm.2} parent=5 // pred_region
        // Predicated region
        $region21: #{basic_block_batchnorm.2} parent=19 // pred_check
          %p178 = pneg %p66
        $region22: #{basic_block_batchnorm.2} parent=19 // pred_check_branch
          %180 = sbr.rel (%p178) target = $region24
        $region23: #{basic_block_batchnorm.2} parent=19 // pred_region
          %s181 = sand.u32 %s56, 1
          %s182 = sand.u32 %s56, 1
          %s183 = smul.addr %s182, 64
          %s184 = scalar_lea.vmem [#allocation2], %s183
          %s185 = smul.addr %s18, 32
          %s186 = sadd.s32 %s19, %s185
          %s187 = smul.addr %s186, 4
          %s188 = scalar_lea.vmem %s1, %s187
          // Predicated region
          $region25: #{basic_block_batchnorm.2} parent=23 // pred_check
            _
          $region26: #{basic_block_batchnorm.2} parent=23 // pred_check_branch
            %190 = sbr.rel (0) target = $region28
          $region27: #{basic_block_batchnorm.2} parent=23 // pred_region
            // Predicated region
            $region29: #{basic_block_batchnorm.2} parent=27 // pred_check
              _
            $region30: #{basic_block_batchnorm.2} parent=27 // pred_check_branch
              %192 = sbr.rel target = $region32
            $region31: #{basic_block_batchnorm.2} parent=27 // pred_region
              // Predicated region
              $region44: #{basic_block_batchnorm.2} parent=31 // pred_check
                _
              $region45: #{basic_block_batchnorm.2} parent=31 // pred_check_branch
                %238 = sbr.rel (0) target = $region47
              $region46: #{basic_block_batchnorm.2} parent=31 // pred_region
                loop: start=0, step=1, limit=1
                $region48: #{basic_block_batchnorm.2} parent=46 // loop_pre_header
                  _
                $region49: #{basic_block_batchnorm.2} parent=46 // loop_header
                  %s240 = sphi 0, %s244
                  %p241 = scmp.ge.s32.totalorder %s240, 1
                  %s245 = sphi %s188, %s188
                  %s246 = sphi %s184, %s184
                $region50: #{basic_block_batchnorm.2} parent=46 // loop_header_branch
                  %243 = sbr.rel (%p241) target = $region54
                $region51: #{basic_block_batchnorm.2} parent=46 // loop_body
                  _
                $region52: #{basic_block_batchnorm.2} parent=46 // loop_footer
                  %s244 = sadd.s32 1, %s240
                $region53: #{basic_block_batchnorm.2} parent=46 // loop_footer_branch
                  %239 = sbr.rel target = $region49
                $region54: #{basic_block_batchnorm.2} parent=46 // loop_exit
                  _
                %s248 = ssub.s32 16, 1
                loop: start=0, step=1, limit=1
                $region55: #{basic_block_batchnorm.2} parent=46 // loop_pre_header
                  _
                $region56: #{basic_block_batchnorm.2} parent=46 // loop_header
                  %s250 = sphi 0, %s254
                  %p251 = scmp.ge.s32.totalorder %s250, 1
                  %s255 = sphi %s188, %s188
                  %s256 = sphi %s184, %s184
                $region57: #{basic_block_batchnorm.2} parent=46 // loop_header_branch
                  %253 = sbr.rel (%p251) target = $region61
                $region58: #{basic_block_batchnorm.2} parent=46 // loop_body
                  %v257 = vld [vmem:[%s255] sm:%s248]
                  %258 = vst [vmem:[%s256] sm:%s248] %v257
                  %v259 = vld [vmem:[%s255 + $0x8] sm:%s248]
                  %260 = vst [vmem:[%s256 + $0x4] sm:%s248] %v259
                  %v261 = vld [vmem:[%s255 + $0x10] sm:%s248]
                  %262 = vst [vmem:[%s256 + $0x8] sm:%s248] %v261
                  %v263 = vld [vmem:[%s255 + $0x18] sm:%s248]
                  %264 = vst [vmem:[%s256 + $0xc] sm:%s248] %v263
                  %v265 = vld [vmem:[%s255 + $0x20] sm:%s248]
                  %266 = vst [vmem:[%s256 + $0x10] sm:%s248] %v265
                  %v267 = vld [vmem:[%s255 + $0x28] sm:%s248]
                  %268 = vst [vmem:[%s256 + $0x14] sm:%s248] %v267
                  %v269 = vld [vmem:[%s255 + $0x30] sm:%s248]
                  %270 = vst [vmem:[%s256 + $0x18] sm:%s248] %v269
                  %v271 = vld [vmem:[%s255 + $0x38] sm:%s248]
                  %272 = vst [vmem:[%s256 + $0x1c] sm:%s248] %v271
                  %v273 = vld [vmem:[%s255 + $0x40] sm:%s248]
                  %274 = vst [vmem:[%s256 + $0x20] sm:%s248] %v273
                  %v275 = vld [vmem:[%s255 + $0x48] sm:%s248]
                  %276 = vst [vmem:[%s256 + $0x24] sm:%s248] %v275
                  %v277 = vld [vmem:[%s255 + $0x50] sm:%s248]
                  %278 = vst [vmem:[%s256 + $0x28] sm:%s248] %v277
                  %v279 = vld [vmem:[%s255 + $0x58] sm:%s248]
                  %280 = vst [vmem:[%s256 + $0x2c] sm:%s248] %v279
                  %v281 = vld [vmem:[%s255 + $0x60] sm:%s248]
                  %282 = vst [vmem:[%s256 + $0x30] sm:%s248] %v281
                  %v283 = vld [vmem:[%s255 + $0x68] sm:%s248]
                  %284 = vst [vmem:[%s256 + $0x34] sm:%s248] %v283
                  %v285 = vld [vmem:[%s255 + $0x70] sm:%s248]
                  %286 = vst [vmem:[%s256 + $0x38] sm:%s248] %v285
                  %v287 = vld [vmem:[%s255 + $0x78] sm:%s248]
                  %288 = vst [vmem:[%s256 + $0x3c] sm:%s248] %v287
                $region59: #{basic_block_batchnorm.2} parent=46 // loop_footer
                  %s254 = sadd.s32 1, %s250
                $region60: #{basic_block_batchnorm.2} parent=46 // loop_footer_branch
                  %249 = sbr.rel target = $region56
                $region61: #{basic_block_batchnorm.2} parent=46 // loop_exit
                  _
              $region47: #{basic_block_batchnorm.2} parent=31 // pred_fallthru
                _
            $region32: #{basic_block_batchnorm.2} parent=27 // pred_fallthru
              _
            // Predicated region
            $region33: #{basic_block_batchnorm.2} parent=27 // pred_check
              _
            $region34: #{basic_block_batchnorm.2} parent=27 // pred_check_branch
              %194 = sbr.rel (0) target = $region36
            $region35: #{basic_block_batchnorm.2} parent=27 // pred_region
              %s196 = ssub.s32 16, 1
              loop: start=0, step=1, limit=1
              $region37: #{basic_block_batchnorm.2} parent=35 // loop_pre_header
                _
              $region38: #{basic_block_batchnorm.2} parent=35 // loop_header
                %s198 = sphi 0, %s202
                %p199 = scmp.ge.s32.totalorder %s198, 1
                %s203 = sphi %s188, %s188
                %s204 = sphi %s184, %s184
              $region39: #{basic_block_batchnorm.2} parent=35 // loop_header_branch
                %201 = sbr.rel (%p199) target = $region43
              $region40: #{basic_block_batchnorm.2} parent=35 // loop_body
                %v205 = vld [vmem:[%s203] sm:%s196]
                %206 = vst [vmem:[%s204] sm:%s196] %v205
                %v207 = vld [vmem:[%s203 + $0x8] sm:%s196]
                %208 = vst [vmem:[%s204 + $0x4] sm:%s196] %v207
                %v209 = vld [vmem:[%s203 + $0x10] sm:%s196]
                %210 = vst [vmem:[%s204 + $0x8] sm:%s196] %v209
                %v211 = vld [vmem:[%s203 + $0x18] sm:%s196]
                %212 = vst [vmem:[%s204 + $0xc] sm:%s196] %v211
                %v213 = vld [vmem:[%s203 + $0x20] sm:%s196]
                %214 = vst [vmem:[%s204 + $0x10] sm:%s196] %v213
                %v215 = vld [vmem:[%s203 + $0x28] sm:%s196]
                %216 = vst [vmem:[%s204 + $0x14] sm:%s196] %v215
                %v217 = vld [vmem:[%s203 + $0x30] sm:%s196]
                %218 = vst [vmem:[%s204 + $0x18] sm:%s196] %v217
                %v219 = vld [vmem:[%s203 + $0x38] sm:%s196]
                %220 = vst [vmem:[%s204 + $0x1c] sm:%s196] %v219
                %v221 = vld [vmem:[%s203 + $0x40] sm:%s196]
                %222 = vst [vmem:[%s204 + $0x20] sm:%s196] %v221
                %v223 = vld [vmem:[%s203 + $0x48] sm:%s196]
                %224 = vst [vmem:[%s204 + $0x24] sm:%s196] %v223
                %v225 = vld [vmem:[%s203 + $0x50] sm:%s196]
                %226 = vst [vmem:[%s204 + $0x28] sm:%s196] %v225
                %v227 = vld [vmem:[%s203 + $0x58] sm:%s196]
                %228 = vst [vmem:[%s204 + $0x2c] sm:%s196] %v227
                %v229 = vld [vmem:[%s203 + $0x60] sm:%s196]
                %230 = vst [vmem:[%s204 + $0x30] sm:%s196] %v229
                %v231 = vld [vmem:[%s203 + $0x68] sm:%s196]
                %232 = vst [vmem:[%s204 + $0x34] sm:%s196] %v231
                %v233 = vld [vmem:[%s203 + $0x70] sm:%s196]
                %234 = vst [vmem:[%s204 + $0x38] sm:%s196] %v233
                %v235 = vld [vmem:[%s203 + $0x78] sm:%s196]
                %236 = vst [vmem:[%s204 + $0x3c] sm:%s196] %v235
              $region41: #{basic_block_batchnorm.2} parent=35 // loop_footer
                %s202 = sadd.s32 1, %s198
              $region42: #{basic_block_batchnorm.2} parent=35 // loop_footer_branch
                %197 = sbr.rel target = $region38
              $region43: #{basic_block_batchnorm.2} parent=35 // loop_exit
                _
            $region36: #{basic_block_batchnorm.2} parent=27 // pred_fallthru
              _
          $region28: #{basic_block_batchnorm.2} parent=23 // pred_fallthru
            _
          %289 = vnop
        $region24: #{basic_block_batchnorm.2} parent=19 // pred_fallthru
          _
      $region20: #{basic_block_batchnorm.2} parent=5 // pred_fallthru
        _
      %p290 = scmp.le.s32.totalorder 1, %s11
      %p291 = scmp.lt.s32.totalorder %s11, 5
      %p292 = pnand %p290, %p291
      %p293 = pneg %p292
      // Predicated region
      $region62: #{basic_block_batchnorm.2} parent=5 // pred_check
        _
      $region63: #{basic_block_batchnorm.2} parent=5 // pred_check_branch
        %295 = sbr.rel (%p292) target = $region65
      $region64: #{basic_block_batchnorm.2} parent=5 // pred_region
        %s296 = ssub.s32 %s11, 1
        %s297 = sand.u32 %s59, 1
        %s298 = sand.u32 %s59, 1
        %s299 = smul.addr %s298, 64
        %s300 = scalar_lea.vmem [#allocation2], %s299
        // Predicated region
        $region66: #{basic_block_batchnorm.2} parent=64 // pred_check
          %p301 = pneg %p72
        $region67: #{basic_block_batchnorm.2} parent=64 // pred_check_branch
          %303 = sbr.rel (%p301) target = $region69
        $region68: #{basic_block_batchnorm.2} parent=64 // pred_region
          _
        $region69: #{basic_block_batchnorm.2} parent=64 // pred_fallthru
          _
        %p304 = pneg %p44
        %p305 = pneg %p41
        %s306 = sand.u32 %s59, 1
        %s307 = sand.u32 %s59, 1
        %s308 = smul.addr %s307, 64
        %s309 = scalar_lea.vmem [#allocation2], %s308
        %p310 = pneg %p72
        %p311 = pneg %p69
        %p312 = pneg %p100
        %p313 = pneg %p97
        %p314 = scmp.lt.s32.totalorder %s20, 1
        %s315 = scalar_select %p314, %s20, 1
        %p316 = scmp.lt.s32.totalorder %s21, 1
        %s317 = scalar_select %p316, %s21, 1
        %s318 = smul.addr %s315, 2
        %s319 = sadd.s32 %s317, %s318
        %s320 = smul.addr %s319, 4
        %s321 = scalar_lea.vmem %s2, %s320
        %p322 = pneg %p128
        %p323 = pneg %p125
        %p324 = scmp.lt.s32.totalorder %s20, 1
        %s325 = scalar_select %p324, %s20, 1
        %p326 = scmp.lt.s32.totalorder %s21, 1
        %s327 = scalar_select %p326, %s21, 1
        %s328 = smul.addr %s325, 2
        %s329 = sadd.s32 %s327, %s328
        %s330 = smul.addr %s329, 8
        %s331 = scalar_lea.vmem %s3, %s330
        %p332 = pneg %p156
        %p333 = pneg %p153
        %p334 = scmp.lt.s32.totalorder %s20, 1
        %s335 = scalar_select %p334, %s20, 1
        %p336 = scmp.lt.s32.totalorder %s21, 1
        %s337 = scalar_select %p336, %s21, 1
        %s338 = smul.addr %s335, 2
        %s339 = sadd.s32 %s337, %s338
        %s340 = smul.addr %s339, 8
        %s341 = scalar_lea.vmem %s4, %s340
        %p342 = scmp.lt.s32.totalorder %s20, 1
        %s343 = scalar_select %p342, %s20, 1
        %p344 = scmp.lt.s32.totalorder %s21, 1
        %s345 = scalar_select %p344, %s21, 1
        %s346 = smul.addr %s343, 2
        %s347 = sadd.s32 %s345, %s346
        %s348 = smul.addr %s347, 4
        %s349 = scalar_lea.vmem %s2, %s348
        %p350 = scmp.lt.s32.totalorder %s20, 1
        %s351 = scalar_select %p350, %s20, 1
        %p352 = scmp.lt.s32.totalorder %s21, 1
        %s353 = scalar_select %p352, %s21, 1
        %s354 = smul.addr %s351, 2
        %s355 = sadd.s32 %s353, %s354
        %s356 = smul.addr %s355, 8
        %s357 = scalar_lea.vmem %s3, %s356
        %p358 = scmp.lt.s32.totalorder %s20, 1
        %s359 = scalar_select %p358, %s20, 1
        %p360 = scmp.lt.s32.totalorder %s21, 1
        %s361 = scalar_select %p360, %s21, 1
        %s362 = smul.addr %s359, 2
        %s363 = sadd.s32 %s361, %s362
        %s364 = smul.addr %s363, 8
        %s365 = scalar_lea.vmem %s4, %s364
        %v366 = vld [vmem:[%s0] sm:$0xf]
        %v367 = vld [vmem:[%s300] sm:$0xf]
        %v368 = vld [vmem:[%s300 + $0x4] sm:$0xf]
        %v369 = vld [vmem:[%s300 + $0x8] sm:$0xf]
        %v370 = vld [vmem:[%s300 + $0xc] sm:$0xf]
        %v371 = vld [vmem:[%s300 + $0x10] sm:$0xf]
        %v372 = vld [vmem:[%s300 + $0x14] sm:$0xf]
        %v373 = vld [vmem:[%s300 + $0x18] sm:$0xf]
        %v374 = vld [vmem:[%s300 + $0x1c] sm:$0xf]
        %v375 = vld [vmem:[%s300 + $0x20] sm:$0xf]
        %v376 = vld [vmem:[%s300 + $0x24] sm:$0xf]
        %v377 = vld [vmem:[%s300 + $0x28] sm:$0xf]
        %v378 = vld [vmem:[%s300 + $0x2c] sm:$0xf]
        %v379 = vld [vmem:[%s300 + $0x30] sm:$0xf]
        %v380 = vld [vmem:[%s300 + $0x34] sm:$0xf]
        %v381 = vld [vmem:[%s300 + $0x38] sm:$0xf]
        %v382 = vld [vmem:[%s300 + $0x3c] sm:$0xf]
        %v399 = vunpack.c.l.b16 %v367
        %v400 = vunpack.c.l.b16 %v368
        %v401 = vunpack.c.l.b16 %v369
        %v402 = vunpack.c.l.b16 %v370
        %v403 = vunpack.c.l.b16 %v371
        %v404 = vunpack.c.l.b16 %v372
        %v405 = vunpack.c.l.b16 %v373
        %v406 = vunpack.c.l.b16 %v374
        %v407 = vunpack.c.l.b16 %v375
        %v408 = vunpack.c.l.b16 %v376
        %v409 = vunpack.c.l.b16 %v377
        %v410 = vunpack.c.l.b16 %v378
        %v411 = vunpack.c.l.b16 %v379
        %v412 = vunpack.c.l.b16 %v380
        %v413 = vunpack.c.l.b16 %v381
        %v414 = vunpack.c.l.b16 %v382
        %v415 = vpack.c.b16 %v400, %v399
        %v416 = vpack.c.b16 %v402, %v401
        %v417 = vpack.c.b16 %v404, %v403
        %v418 = vpack.c.b16 %v406, %v405
        %v419 = vpack.c.b16 %v408, %v407
        %v420 = vpack.c.b16 %v410, %v409
        %v421 = vpack.c.b16 %v412, %v411
        %v422 = vpack.c.b16 %v414, %v413
        %431 = vmatpush.bf16.msra.mxu0 %v422
        %432 = vmatpush.bf16.msra.mxu0 %v421
        %433 = vmatpush.bf16.msra.mxu0 %v420
        %434 = vmatpush.bf16.msra.mxu0 %v419
        %435 = vmatpush.bf16.msra.mxu0 %v418
        %436 = vmatpush.bf16.msra.mxu0 %v417
        %437 = vmatpush.bf16.msra.mxu0 %v416
        %438 = vmatpush.bf16.msra.mxu0 %v415
        %439 = vmatmul.bf16.gmra.mxu0 %v366
        %v440 = vpop.f32.mrf.mxu0
        %v441 = vadd.f32 0.0, %v440
        %v442 = vpop.f32.mrf.mxu0
        %443 = vdwg.mxu0
        %v444 = vpack.c.bf16 %v441, %v441
        %445 = vst [vmem:[%s349] sm:$0xf] %v444
        %s446 = smul.u32 %s21, 128
        %s447 = ssub.s32 256, %s446
        %p448 = scmp.lt.s32.totalorder %s447, 128
        %s449 = scalar_select %p448, %s447, 128
        %s450 = scvt.s32.f32 %s449
        %451 = vadd.xlane.f32.xlu0 %v441
        %v452 = vpop.xlane.xlu0 %451
        %v453 = vstv %s450
        %v454 = vrcp.pop %v453
        %v455 = vmul.f32 %v453, %v454
        %v456 = vsub.f32 1.0, %v455
        %v457 = vmul.f32 %v454, %v456
        %v458 = vadd.f32 %v454, %v457
        %vm459 = vweird.f32 %v453
        %vm460 = vweird.f32 %v454
        %vm461 = vmor %vm459, %vm460
        %v462 = vsel %vm461, %v454, %v458
        %v463 = vand.u32 2147483647, %v453
        %vm464 = vcmp.eq.f32.partialorder %v463, 8.507059e+37
        %v465 = vand.u32 %v453, 2147483648
        %v466 = vor.u32 1.1754944e-38, %v465
        %v467 = vsel %vm464, %v466, %v462
        %v468 = vmul.f32 %v452, %v467
        %v469 = vsub.f32 %v441, %v468
        %v470 = vmul.f32 %v469, %v469
        %471 = vadd.xlane.f32.xlu0 %v470
        %v472 = vpop.xlane.xlu0 %471
        %vm473 = vcmask 7168
        %474 = vst.msk [vmem:[%s357] sm:$0xff] %vm473, %v452
        %475 = vst.msk [vmem:[%s365] sm:$0xff] %vm473, %v472
        %p476 = scmp.lt.s32.totalorder %s20, 1
        %s477 = scalar_select %p476, %s20, 1
        %p478 = scmp.lt.s32.totalorder %s21, 1
        %s479 = scalar_select %p478, %s21, 1
        %s480 = smul.addr %s477, 2
        %s481 = sadd.s32 %s479, %s480
        %s482 = smul.addr %s481, 4
        %s483 = scalar_lea.vmem %s2, %s482
        %p484 = scmp.lt.s32.totalorder %s20, 1
        %s485 = scalar_select %p484, %s20, 1
        %p486 = scmp.lt.s32.totalorder %s21, 1
        %s487 = scalar_select %p486, %s21, 1
        %s488 = smul.addr %s485, 2
        %s489 = sadd.s32 %s487, %s488
        %s490 = smul.addr %s489, 8
        %s491 = scalar_lea.vmem %s3, %s490
        %p492 = scmp.lt.s32.totalorder %s20, 1
        %s493 = scalar_select %p492, %s20, 1
        %p494 = scmp.lt.s32.totalorder %s21, 1
        %s495 = scalar_select %p494, %s21, 1
        %s496 = smul.addr %s493, 2
        %s497 = sadd.s32 %s495, %s496
        %s498 = smul.addr %s497, 8
        %s499 = scalar_lea.vmem %s4, %s498
        // Predicated region
        $region70: #{basic_block_batchnorm.2} parent=64 // pred_check
          %p500 = pneg %p97
        $region71: #{basic_block_batchnorm.2} parent=64 // pred_check_branch
          %502 = sbr.rel (%p500) target = $region73
        $region72: #{basic_block_batchnorm.2} parent=64 // pred_region
          _
        $region73: #{basic_block_batchnorm.2} parent=64 // pred_fallthru
          _
        // Predicated region
        $region74: #{basic_block_batchnorm.2} parent=64 // pred_check
          %p503 = pneg %p125
        $region75: #{basic_block_batchnorm.2} parent=64 // pred_check_branch
          %505 = sbr.rel (%p503) target = $region77
        $region76: #{basic_block_batchnorm.2} parent=64 // pred_region
          _
        $region77: #{basic_block_batchnorm.2} parent=64 // pred_fallthru
          _
        // Predicated region
        $region78: #{basic_block_batchnorm.2} parent=64 // pred_check
          %p506 = pneg %p153
        $region79: #{basic_block_batchnorm.2} parent=64 // pred_check_branch
          %508 = sbr.rel (%p506) target = $region81
        $region80: #{basic_block_batchnorm.2} parent=64 // pred_region
          _
        $region81: #{basic_block_batchnorm.2} parent=64 // pred_fallthru
          _
      $region65: #{basic_block_batchnorm.2} parent=5 // pred_fallthru
        _
      %p509 = scmp.le.s32.totalorder 2, %s11
      // Predicated region
      $region82: #{basic_block_batchnorm.2} parent=5 // pred_check
        %p510 = pneg %p509
      $region83: #{basic_block_batchnorm.2} parent=5 // pred_check_branch
        %512 = sbr.rel (%p510) target = $region85
      $region84: #{basic_block_batchnorm.2} parent=5 // pred_region
        %s513 = ssub.s32 %s11, 2
        // Predicated region
        $region86: #{basic_block_batchnorm.2} parent=84 // pred_check
          %p514 = pneg %p103
        $region87: #{basic_block_batchnorm.2} parent=84 // pred_check_branch
          %516 = sbr.rel (%p514) target = $region89
        $region88: #{basic_block_batchnorm.2} parent=84 // pred_region
          %p517 = scmp.lt.s32.totalorder %s22, 1
          %s518 = scalar_select %p517, %s22, 1
          %p519 = scmp.lt.s32.totalorder %s23, 1
          %s520 = scalar_select %p519, %s23, 1
          %s521 = smul.addr %s518, 2
          %s522 = sadd.s32 %s520, %s521
          %s523 = smul.addr %s522, 4
          %s524 = scalar_lea.vmem %s2, %s523
        $region89: #{basic_block_batchnorm.2} parent=84 // pred_fallthru
          _
        // Predicated region
        $region90: #{basic_block_batchnorm.2} parent=84 // pred_check
          %p525 = pneg %p131
        $region91: #{basic_block_batchnorm.2} parent=84 // pred_check_branch
          %527 = sbr.rel (%p525) target = $region93
        $region92: #{basic_block_batchnorm.2} parent=84 // pred_region
          %p528 = scmp.lt.s32.totalorder %s22, 1
          %s529 = scalar_select %p528, %s22, 1
          %p530 = scmp.lt.s32.totalorder %s23, 1
          %s531 = scalar_select %p530, %s23, 1
          %s532 = smul.addr %s529, 2
          %s533 = sadd.s32 %s531, %s532
          %s534 = smul.addr %s533, 8
          %s535 = scalar_lea.vmem %s3, %s534
        $region93: #{basic_block_batchnorm.2} parent=84 // pred_fallthru
          _
        // Predicated region
        $region94: #{basic_block_batchnorm.2} parent=84 // pred_check
          %p536 = pneg %p159
        $region95: #{basic_block_batchnorm.2} parent=84 // pred_check_branch
          %538 = sbr.rel (%p536) target = $region97
        $region96: #{basic_block_batchnorm.2} parent=84 // pred_region
          %p539 = scmp.lt.s32.totalorder %s22, 1
          %s540 = scalar_select %p539, %s22, 1
          %p541 = scmp.lt.s32.totalorder %s23, 1
          %s542 = scalar_select %p541, %s23, 1
          %s543 = smul.addr %s540, 2
          %s544 = sadd.s32 %s542, %s543
          %s545 = smul.addr %s544, 8
          %s546 = scalar_lea.vmem %s4, %s545
        $region97: #{basic_block_batchnorm.2} parent=84 // pred_fallthru
          _
      $region85: #{basic_block_batchnorm.2} parent=5 // pred_fallthru
        _
    $region6: #{basic_block_batchnorm.2} parent=1 // loop_footer
      %s15 = sadd.s32 1, %s11
    $region7: #{basic_block_batchnorm.2} parent=1 // loop_footer_branch
      %10 = sbr.rel target = $region3
    $region8: #{basic_block_batchnorm.2} parent=1 // loop_exit
      _

// kernel: basic_block_batchnorm.3
$region0: #{basic_block_batchnorm.3}
  #allocation0 [shape = 'u32[]', space=smem, size = 0x4, offset = 0x4, fixed_abs, tag = 'smem constant byte address 0x4 - core index']
  #allocation1 [shape = 'u32[72,128]{1,0:T(1,128)}', space=vmem, size = 0x9000, scoped, tag = 'internal scratch']
  %s0 = inlined_call_operand.vmem [shape: f32[8,1], index: 0, kind: input, shape index: {}]
  %s1 = inlined_call_operand.vmem [shape: f32[8,1], index: 1, kind: input, shape index: {}]
  %s2 = inlined_call_operand.vmem [shape: bf16[2,8,256], index: 2, kind: input, shape index: {}]
  %s3 = inlined_call_operand.vmem [shape: f32[2,8,256], index: 3, kind: output, shape index: {}]
  %s4 = sld [smem:[#allocation0]]
  $region45: #{basic_block_batchnorm.3} parent=0
    _
  %s6 = ssub.s32 1, %s4
  %s7 = scalar_select 0, %s6, %s4
  loop: start=0, step=1, limit=6
  $region2: #{basic_block_batchnorm.3} parent=0 // loop_pre_header
    _
  $region3: #{basic_block_batchnorm.3} parent=0 // loop_header
    %s9 = sphi 0, %s13
    %p10 = scmp.ge.s32.totalorder %s9, 6
    %s16 = sphi 0, %s28
    %s17 = sphi 0, %s24
    %s18 = sphi 0, %s16
    %s19 = sphi 0, %s17
    %s20 = sphi 0, %s18
    %s21 = sphi 0, %s19
    %s29 = sphi 0, %s29
    %s31 = sphi 0, %s29
    %s32 = sphi 0, %s31
    %s46 = sphi 0, %s32
    %s50 = sphi 0, %s50
    %s52 = sphi 0, %s50
    %s53 = sphi 0, %s52
    %s67 = sphi 0, %s53
    %s75 = sphi 0, %s77
    %s78 = sphi 0, %s75
    %s79 = sphi 0, %s78
    %s95 = sphi 0, %s79
    %s103 = sphi 0, %s105
    %s106 = sphi 0, %s103
    %s107 = sphi 0, %s106
    %s123 = sphi 0, %s107
  $region4: #{basic_block_batchnorm.3} parent=0 // loop_header_branch
    %12 = sbr.rel (%p10) target = $region8
  $region5: #{basic_block_batchnorm.3} parent=0 // loop_body
    %s14 = ssub.s32 %s9, 1
    %s15 = ssub.s32 %s9, 2
    %s22 = sadd.s32 1, %s17
    %p23 = scmp.ge.s32.totalorder %s22, 2
    %s24 = scalar_select %p23, 0, %s22
    %s25 = sadd.s32 1, %s16
    %s26 = scalar_select %p23, %s25, %s16
    %p27 = scmp.ge.s32.totalorder %s26, 2
    %s28 = scalar_select %p27, 0, %s26
    %s30 = sadd.s32 %s29, 1
    %p33 = scmp.eq.s32.totalorder %s9, 3
    %p34 = scmp.ne.s32.totalorder %s29, %s31
    %p35 = scmp.eq.s32.totalorder %s9, 0
    %p36 = por %p34, %p35
    %p37 = scmp.ne.s32.totalorder %s29, %s31
    %p38 = scmp.eq.s32.totalorder %s14, 3
    %p39 = por %p37, %p38
    %p40 = scmp.ne.s32.totalorder %s31, %s32
    %p41 = scmp.eq.s32.totalorder %s14, 0
    %p42 = por %p40, %p41
    %p43 = scmp.ne.s32.totalorder %s31, %s32
    %p44 = scmp.eq.s32.totalorder %s15, 3
    %p45 = por %p43, %p44
    %p47 = scmp.ne.s32.totalorder %s32, %s46
    %p48 = scmp.eq.s32.totalorder %s15, 0
    %p49 = por %p47, %p48
    %s51 = sadd.s32 %s50, 1
    %p54 = scmp.eq.s32.totalorder %s9, 3
    %p55 = scmp.ne.s32.totalorder %s50, %s52
    %p56 = scmp.eq.s32.totalorder %s9, 0
    %p57 = por %p55, %p56
    %p58 = scmp.ne.s32.totalorder %s50, %s52
    %p59 = scmp.eq.s32.totalorder %s14, 3
    %p60 = por %p58, %p59
    %p61 = scmp.ne.s32.totalorder %s52, %s53
    %p62 = scmp.eq.s32.totalorder %s14, 0
    %p63 = por %p61, %p62
    %p64 = scmp.ne.s32.totalorder %s52, %s53
    %p65 = scmp.eq.s32.totalorder %s15, 3
    %p66 = por %p64, %p65
    %p68 = scmp.ne.s32.totalorder %s53, %s67
    %p69 = scmp.eq.s32.totalorder %s15, 0
    %p70 = por %p68, %p69
    %s71 = ssub.s32 %s16, %s28
    %s72 = ssub.s32 %s17, %s24
    %s73 = sor.u32 %s71, %s72
    %p74 = scmp.eq.s32.totalorder %s73, 0
    %s76 = sadd.s32 %s75, 1
    %s77 = scalar_select %p74, %s75, %s76
    %p80 = pneg %p74
    %p81 = scmp.eq.s32.totalorder %s9, 3
    %p82 = por %p80, %p81
    %p83 = scmp.ne.s32.totalorder %s75, %s78
    %p84 = scmp.eq.s32.totalorder %s9, 0
    %p85 = por %p83, %p84
    %p86 = scmp.ne.s32.totalorder %s75, %s78
    %p87 = scmp.eq.s32.totalorder %s14, 3
    %p88 = por %p86, %p87
    %p89 = scmp.ne.s32.totalorder %s78, %s79
    %p90 = scmp.eq.s32.totalorder %s14, 0
    %p91 = por %p89, %p90
    %p92 = scmp.ne.s32.totalorder %s78, %s79
    %p93 = scmp.eq.s32.totalorder %s15, 3
    %p94 = por %p92, %p93
    %p96 = scmp.ne.s32.totalorder %s79, %s95
    %p97 = scmp.eq.s32.totalorder %s15, 0
    %p98 = por %p96, %p97
    %s99 = ssub.s32 %s16, %s28
    %s100 = ssub.s32 %s17, %s24
    %s101 = sor.u32 %s99, %s100
    %p102 = scmp.eq.s32.totalorder %s101, 0
    %s104 = sadd.s32 %s103, 1
    %s105 = scalar_select %p102, %s103, %s104
    %p108 = pneg %p102
    %p109 = scmp.eq.s32.totalorder %s9, 3
    %p110 = por %p108, %p109
    %p111 = scmp.ne.s32.totalorder %s103, %s106
    %p112 = scmp.eq.s32.totalorder %s9, 0
    %p113 = por %p111, %p112
    %p114 = scmp.ne.s32.totalorder %s103, %s106
    %p115 = scmp.eq.s32.totalorder %s14, 3
    %p116 = por %p114, %p115
    %p117 = scmp.ne.s32.totalorder %s106, %s107
    %p118 = scmp.eq.s32.totalorder %s14, 0
    %p119 = por %p117, %p118
    %p120 = scmp.ne.s32.totalorder %s106, %s107
    %p121 = scmp.eq.s32.totalorder %s15, 3
    %p122 = por %p120, %p121
    %p124 = scmp.ne.s32.totalorder %s107, %s123
    %p125 = scmp.eq.s32.totalorder %s15, 0
    %p126 = por %p124, %p125
    %p127 = scmp.le.s32.totalorder 1, %s9
    %p128 = scmp.lt.s32.totalorder %s9, 5
    %p129 = pnand %p127, %p128
    %p130 = pneg %p129
    // Predicated region
    $region9: #{basic_block_batchnorm.3} parent=5 // pred_check
      _
    $region10: #{basic_block_batchnorm.3} parent=5 // pred_check_branch
      %132 = sbr.rel (%p129) target = $region12
    $region11: #{basic_block_batchnorm.3} parent=5 // pred_region
      %s133 = ssub.s32 %s9, 1
      // Predicated region
      $region13: #{basic_block_batchnorm.3} parent=11 // pred_check
        %p134 = pneg %p42
      $region14: #{basic_block_batchnorm.3} parent=11 // pred_check_branch
        %136 = sbr.rel (%p134) target = $region16
      $region15: #{basic_block_batchnorm.3} parent=11 // pred_region
        _
      $region16: #{basic_block_batchnorm.3} parent=11 // pred_fallthru
        _
      // Predicated region
      $region17: #{basic_block_batchnorm.3} parent=11 // pred_check
        %p137 = pneg %p63
      $region18: #{basic_block_batchnorm.3} parent=11 // pred_check_branch
        %139 = sbr.rel (%p137) target = $region20
      $region19: #{basic_block_batchnorm.3} parent=11 // pred_region
        _
      $region20: #{basic_block_batchnorm.3} parent=11 // pred_fallthru
        _
    $region12: #{basic_block_batchnorm.3} parent=5 // pred_fallthru
      _
    %p140 = scmp.lt.s32.totalorder %s9, 4
    // Predicated region
    $region21: #{basic_block_batchnorm.3} parent=5 // pred_check
      %p141 = pneg %p140
    $region22: #{basic_block_batchnorm.3} parent=5 // pred_check_branch
      %143 = sbr.rel (%p141) target = $region24
    $region23: #{basic_block_batchnorm.3} parent=5 // pred_region
      // Predicated region
      $region25: #{basic_block_batchnorm.3} parent=23 // pred_check
        %p144 = pneg %p85
      $region26: #{basic_block_batchnorm.3} parent=23 // pred_check_branch
        %146 = sbr.rel (%p144) target = $region28
      $region27: #{basic_block_batchnorm.3} parent=23 // pred_region
        %p147 = scmp.lt.s32.totalorder %s16, 1
        %s148 = scalar_select %p147, %s16, 1
        %p149 = scmp.lt.s32.totalorder %s17, 1
        %s150 = scalar_select %p149, %s17, 1
        %s151 = smul.addr %s148, 2
        %s152 = sadd.s32 %s150, %s151
        %s153 = smul.addr %s152, 4
        %s154 = scalar_lea.vmem %s2, %s153
      $region28: #{basic_block_batchnorm.3} parent=23 // pred_fallthru
        _
    $region24: #{basic_block_batchnorm.3} parent=5 // pred_fallthru
      _
    %p155 = scmp.le.s32.totalorder 1, %s9
    %p156 = scmp.lt.s32.totalorder %s9, 5
    %p157 = pnand %p155, %p156
    %p158 = pneg %p157
    // Predicated region
    $region29: #{basic_block_batchnorm.3} parent=5 // pred_check
      _
    $region30: #{basic_block_batchnorm.3} parent=5 // pred_check_branch
      %160 = sbr.rel (%p157) target = $region32
    $region31: #{basic_block_batchnorm.3} parent=5 // pred_region
      %s161 = ssub.s32 %s9, 1
      %p162 = pneg %p42
      %p163 = pneg %p39
      %p164 = pneg %p63
      %p165 = pneg %p60
      %p166 = scmp.lt.s32.totalorder %s18, 1
      %s167 = scalar_select %p166, %s18, 1
      %p168 = scmp.lt.s32.totalorder %s19, 1
      %s169 = scalar_select %p168, %s19, 1
      %s170 = smul.addr %s167, 2
      %s171 = sadd.s32 %s169, %s170
      %s172 = smul.addr %s171, 4
      %s173 = scalar_lea.vmem %s2, %s172
      %p174 = pneg %p91
      %p175 = pneg %p88
      %p176 = pneg %p119
      %p177 = pneg %p116
      %p178 = scmp.lt.s32.totalorder %s18, 1
      %s179 = scalar_select %p178, %s18, 1
      %p180 = scmp.lt.s32.totalorder %s19, 1
      %s181 = scalar_select %p180, %s19, 1
      %s182 = smul.addr %s179, 2
      %s183 = sadd.s32 %s181, %s182
      %s184 = smul.addr %s183, 8
      %s185 = scalar_lea.vmem %s3, %s184
      %p186 = scmp.lt.s32.totalorder %s18, 1
      %s187 = scalar_select %p186, %s18, 1
      %p188 = scmp.lt.s32.totalorder %s19, 1
      %s189 = scalar_select %p188, %s19, 1
      %s190 = smul.addr %s187, 2
      %s191 = sadd.s32 %s189, %s190
      %s192 = smul.addr %s191, 4
      %s193 = scalar_lea.vmem %s2, %s192
      %p194 = scmp.lt.s32.totalorder %s18, 1
      %s195 = scalar_select %p194, %s18, 1
      %p196 = scmp.lt.s32.totalorder %s19, 1
      %s197 = scalar_select %p196, %s19, 1
      %s198 = smul.addr %s195, 2
      %s199 = sadd.s32 %s197, %s198
      %s200 = smul.addr %s199, 8
      %s201 = scalar_lea.vmem %s3, %s200
      %v202 = vld [vmem:[%s193] sm:$0xf]
      %v203 = vunpack.c.l.bf16 %v202
      %v204 = vld [vmem:[%s0] sm:$0xff]
      %206 = vset.pattern.permute.xlu0 0
      %207 = vperm.xlu0 %206, %v204
      %v208 = vpop.permute.xlu0 %207
      %v210 = vmul.f32 %v203, %v208
      %v211 = vld [vmem:[%s1] sm:$0xff]
      %213 = vset.pattern.permute.xlu0 0
      %214 = vperm.xlu0 %213, %v211
      %v215 = vpop.permute.xlu0 %214
      %v217 = vadd.f32 %v210, %v215
      %v218 = vmax.f32 %v217, 0.0
      %219 = vst [vmem:[%s201] sm:$0xff] %v218
      %p220 = scmp.lt.s32.totalorder %s18, 1
      %s221 = scalar_select %p220, %s18, 1
      %p222 = scmp.lt.s32.totalorder %s19, 1
      %s223 = scalar_select %p222, %s19, 1
      %s224 = smul.addr %s221, 2
      %s225 = sadd.s32 %s223, %s224
      %s226 = smul.addr %s225, 8
      %s227 = scalar_lea.vmem %s3, %s226
      // Predicated region
      $region33: #{basic_block_batchnorm.3} parent=31 // pred_check
        %p228 = pneg %p116
      $region34: #{basic_block_batchnorm.3} parent=31 // pred_check_branch
        %230 = sbr.rel (%p228) target = $region36
      $region35: #{basic_block_batchnorm.3} parent=31 // pred_region
        _
      $region36: #{basic_block_batchnorm.3} parent=31 // pred_fallthru
        _
    $region32: #{basic_block_batchnorm.3} parent=5 // pred_fallthru
      _
    %p231 = scmp.le.s32.totalorder 2, %s9
    // Predicated region
    $region37: #{basic_block_batchnorm.3} parent=5 // pred_check
      %p232 = pneg %p231
    $region38: #{basic_block_batchnorm.3} parent=5 // pred_check_branch
      %234 = sbr.rel (%p232) target = $region40
    $region39: #{basic_block_batchnorm.3} parent=5 // pred_region
      %s235 = ssub.s32 %s9, 2
      // Predicated region
      $region41: #{basic_block_batchnorm.3} parent=39 // pred_check
        %p236 = pneg %p122
      $region42: #{basic_block_batchnorm.3} parent=39 // pred_check_branch
        %238 = sbr.rel (%p236) target = $region44
      $region43: #{basic_block_batchnorm.3} parent=39 // pred_region
        %p239 = scmp.lt.s32.totalorder %s20, 1
        %s240 = scalar_select %p239, %s20, 1
        %p241 = scmp.lt.s32.totalorder %s21, 1
        %s242 = scalar_select %p241, %s21, 1
        %s243 = smul.addr %s240, 2
        %s244 = sadd.s32 %s242, %s243
        %s245 = smul.addr %s244, 8
        %s246 = scalar_lea.vmem %s3, %s245
      $region44: #{basic_block_batchnorm.3} parent=39 // pred_fallthru
        _
    $region40: #{basic_block_batchnorm.3} parent=5 // pred_fallthru
      _
  $region6: #{basic_block_batchnorm.3} parent=0 // loop_footer
    %s13 = sadd.s32 1, %s9
  $region7: #{basic_block_batchnorm.3} parent=0 // loop_footer_branch
    %8 = sbr.rel target = $region3
  $region8: #{basic_block_batchnorm.3} parent=0 // loop_exit
    _

</llo_original>
